<compile_context>
chip_gen: v7x
topology: tpu7x:2x2x1
jax: 0.10.0
libtpu: 0.0.40
codegen_flags: <defaults>
</compile_context>

<pallas_src>
import functools

import jax
import jax.numpy as jnp
from jax.experimental import pallas as pl
from jax.experimental.pallas import tpu as pltpu


def _round_up(x: int, m: int) -> int:
    return ((x + m - 1) // m) * m


# ---- shared-range-reduction sin/cos (Cody-Waite + cephes single-prec polys) ----
_TWO_OVER_PI = 0.6366197723675814
_PIO2_HI = 1.5703125                 # pi/2 split into three f32-exact pieces
_PIO2_MID = 4.837512969970703e-4
_PIO2_LO = 7.549789948768648e-8


def _sincos_shared(x):
    """Returns (sin(x), cos(x)) for f32 x >= 0 with one shared range reduction."""
    q = jnp.round(x * _TWO_OVER_PI)                  # quadrant count (f32)
    r = x - q * _PIO2_HI
    r = r - q * _PIO2_MID
    r = r - q * _PIO2_LO                             # r in [-pi/4, pi/4]
    r2 = r * r
    sin_p = r + r * r2 * (-1.6666654611e-1
                          + r2 * (8.3321608736e-3
                                  + r2 * (-1.9515295891e-4)))
    cos_p = 1.0 - 0.5 * r2 + r2 * r2 * (4.166664568298827e-2
                                        + r2 * (-1.388731625493765e-3
                                                + r2 * 2.443315711809948e-5))
    n = q.astype(jnp.int32) & 3
    swap = (n & 1) == 1
    s_base = jnp.where(swap, cos_p, sin_p)
    c_base = jnp.where(swap, sin_p, cos_p)
    sin_val = jnp.where(n >= 2, -s_base, s_base)
    cos_val = jnp.where((n == 1) | (n == 2), -c_base, c_base)
    return sin_val, cos_val


def _rope_cache_kernel(inv_freq_ref, cos_ref, sin_ref, *, tile_s, half_compute):
    # inv_freq_ref: [1, ncols] where ncols = dim (full) or dim//2 (half_compute).
    # cos_ref/sin_ref: [tile_s, dim] output tiles for this grid step.
    i = pl.program_id(0)
    pos = (i * tile_s
           + jax.lax.broadcasted_iota(jnp.int32, (tile_s, 1), 0)).astype(jnp.float32)
    angles = pos * inv_freq_ref[...]                 # [tile_s, ncols], f32
    s, c = _sincos_shared(angles)
    if half_compute:
        half = cos_ref.shape[-1] // 2
        c = c.astype(cos_ref.dtype)
        s = s.astype(sin_ref.dtype)
        cos_ref[:, :half] = c
        cos_ref[:, half:] = c
        sin_ref[:, :half] = s
        sin_ref[:, half:] = s
    else:
        cos_ref[...] = c.astype(cos_ref.dtype)
        sin_ref[...] = s.astype(sin_ref.dtype)


def _build_rope_cache(inv_freq, seq_len, dim, dtype):
    """Builds (cos, sin) caches of shape [seq_len, dim] with a Pallas kernel."""
    assert dim % 2 == 0, "rotary dim must be even"
    half = dim // 2
    # Compute only the unique dim/2 columns when that half is itself lane-dense.
    half_compute = (half >= 128) and (half % 128 == 0)
    if half_compute:
        inv_freq_in = inv_freq[None, :].astype(jnp.float32)                 # [1, dim/2]
    else:
        inv_freq_in = jnp.concatenate([inv_freq, inv_freq])[None, :].astype(jnp.float32)  # [1, dim]
    ncols = int(inv_freq_in.shape[-1])

    # Large, sublane-aligned tiles; per-step VMEM stays far below the limit.
    tile_s = min(2048, _round_up(max(seq_len, 1), 8))
    # Make sure there are >= 2 grid steps so the "parallel" axis can shard
    # across both TensorCores on v7x (no-op cost on v5e/v6e).
    if seq_len > 8 and pl.cdiv(seq_len, tile_s) < 2:
        tile_s = _round_up(pl.cdiv(seq_len, 2), 8)
    grid = (pl.cdiv(seq_len, tile_s),)

    cos, sin = pl.pallas_call(
        functools.partial(_rope_cache_kernel, tile_s=tile_s,
                          half_compute=half_compute),
        out_shape=(
            jax.ShapeDtypeStruct((seq_len, dim), dtype),
            jax.ShapeDtypeStruct((seq_len, dim), dtype),
        ),
        grid=grid,
        in_specs=[
            # Tiny grid-invariant block: resident in VMEM across all steps.
            pl.BlockSpec((1, ncols), lambda i: (0, 0)),
        ],
        out_specs=(
            pl.BlockSpec((tile_s, dim), lambda i: (i, 0)),
            pl.BlockSpec((tile_s, dim), lambda i: (i, 0)),
        ),
        compiler_params=pltpu.CompilerParams(
            dimension_semantics=("parallel",),
        ),
    )(inv_freq_in)
    return cos, sin


class MistralRotaryEmbedding:
    """JAX/Pallas port of the PyTorch MistralRotaryEmbedding module."""

    def __init__(self, dim, max_position_embeddings=2048, base=10000.0,
                 dtype=jnp.float32):
        assert dim % 2 == 0, "rotary dim must be even"
        self.dim = dim
        self.max_position_embeddings = max_position_embeddings
        self.base = float(base)
        self.inv_freq = 1.0 / (
            self.base ** (jnp.arange(0, dim, 2, dtype=jnp.float32) / dim)
        )
        self._set_cos_sin_cache(seq_len=max_position_embeddings, dtype=dtype)

    def _set_cos_sin_cache(self, seq_len, dtype):
        self.max_seq_len_cached = seq_len
        self.cache_dtype = dtype
        cos, sin = _build_rope_cache(self.inv_freq, seq_len, self.dim, dtype)
        self.cos_cached = cos
        self.sin_cached = sin

    def __call__(self, x, seq_len=None):
        if seq_len is None:
            seq_len = self.max_seq_len_cached
        if seq_len > self.max_seq_len_cached:
            self._set_cos_sin_cache(seq_len=seq_len, dtype=x.dtype)
        if seq_len == self.max_seq_len_cached:
            cos, sin = self.cos_cached, self.sin_cached
        else:
            cos, sin = self.cos_cached[:seq_len], self.sin_cached[:seq_len]
        if cos.dtype != x.dtype:
            cos = cos.astype(x.dtype)
            sin = sin.astype(x.dtype)
        return cos, sin


if __name__ == "__main__":
    # Small shapes consistent with the module: head_dim=128 (lane-dense),
    # a short cached max length, and a [batch, seq, head_dim] activation that
    # only supplies dtype (as in the original forward).
    dim = 128
    max_position_embeddings = 64
    batch, seq_len = 2, 8

    key = jax.random.PRNGKey(0)
    x = jax.random.normal(key, (batch, seq_len, dim), dtype=jnp.float32)

    rope = MistralRotaryEmbedding(dim, max_position_embeddings=max_position_embeddings)
    cos, sin = rope(x, seq_len=seq_len)
    cos = jax.block_until_ready(cos)
    sin = jax.block_until_ready(sin)

    # Pure-JAX reference (mirrors the PyTorch buffer construction).
    inv_freq = 1.0 / (10000.0 ** (jnp.arange(0, dim, 2, dtype=jnp.float32) / dim))
    t = jnp.arange(seq_len, dtype=jnp.float32)
    freqs = jnp.outer(t, inv_freq)
    emb = jnp.concatenate([freqs, freqs], axis=-1)
    ref_cos = jnp.cos(emb).astype(x.dtype)
    ref_sin = jnp.sin(emb).astype(x.dtype)

    assert cos.shape == (seq_len, dim) and sin.shape == (seq_len, dim)
    assert jnp.allclose(cos, ref_cos, atol=1e-5, rtol=1e-5)
    assert jnp.allclose(sin, ref_sin, atol=1e-5, rtol=1e-5)

    # Also check the full cached table (covers multi-tile grid + partial logic).
    full_cos, full_sin = rope(x, seq_len=max_position_embeddings)
    t_full = jnp.arange(max_position_embeddings, dtype=jnp.float32)
    emb_full = jnp.concatenate([jnp.outer(t_full, inv_freq)] * 2, axis=-1)
    assert jnp.allclose(full_cos, jnp.cos(emb_full), atol=1e-5, rtol=1e-5)
    assert jnp.allclose(full_sin, jnp.sin(emb_full), atol=1e-5, rtol=1e-5)

    print("KERNEL_OK")
</pallas_src>

<mosaic_0001>
module attributes {stable_mosaic.version = 11 : i64} {
  func.func @_rope_cache_kernel(%arg0: i32, %arg1: memref<1x128xf32, #tpu.memory_space<vmem>>, %arg2: memref<32x128xf32, #tpu.memory_space<vmem>>, %arg3: memref<32x128xf32, #tpu.memory_space<vmem>>) attributes {dimension_semantics = [#tpu.dimension_semantics<parallel>], iteration_bounds = array<i64: 2>, scalar_prefetch = 0 : i64, scratch_operands = 0 : i64, tpu.core_type = #tpu.core_type<tc>, window_params = [{pipeline_mode = #tpu.pipeline_mode<synchronous>, transform_indices = @transform_0, window_bounds = array<i64: 1, 128>}, {transform_indices = @transform_1, window_bounds = array<i64: 32, 128>}, {transform_indices = @transform_2, window_bounds = array<i64: 32, 128>}]} {
    %c32_i32 = arith.constant 32 : i32
    %0 = arith.muli %arg0, %c32_i32 : i32
    %1 = tpu.iota {dimensions = array<i32: 0>} : vector<32x1xi32>
    %2 = vector.broadcast %0 : i32 to vector<32x1xi32>
    %3 = arith.addi %2, %1 : vector<32x1xi32>
    %4 = arith.sitofp %3 : vector<32x1xi32> to vector<32x1xf32>
    %c0 = arith.constant 0 : index
    %c0_0 = arith.constant 0 : index
    %5 = vector.load %arg1[%c0, %c0_0] : memref<1x128xf32, #tpu.memory_space<vmem>>, vector<1x128xf32>
    %6 = vector.broadcast %4 : vector<32x1xf32> to vector<32x128xf32>
    %7 = vector.broadcast %5 : vector<1x128xf32> to vector<32x128xf32>
    %8 = arith.mulf %6, %7 : vector<32x128xf32>
    %cst = arith.constant 0.636619746 : f32
    %9 = vector.broadcast %cst : f32 to vector<32x128xf32>
    %10 = arith.mulf %8, %9 : vector<32x128xf32>
    %11 = math.roundeven %10 : vector<32x128xf32>
    %cst_1 = arith.constant 1.5703125 : f32
    %12 = vector.broadcast %cst_1 : f32 to vector<32x128xf32>
    %13 = arith.mulf %11, %12 : vector<32x128xf32>
    %14 = arith.subf %8, %13 : vector<32x128xf32>
    %cst_2 = arith.constant 4.83751297E-4 : f32
    %15 = vector.broadcast %cst_2 : f32 to vector<32x128xf32>
    %16 = arith.mulf %11, %15 : vector<32x128xf32>
    %17 = arith.subf %14, %16 : vector<32x128xf32>
    %cst_3 = arith.constant 7.549790e-08 : f32
    %18 = vector.broadcast %cst_3 : f32 to vector<32x128xf32>
    %19 = arith.mulf %11, %18 : vector<32x128xf32>
    %20 = arith.subf %17, %19 : vector<32x128xf32>
    %21 = arith.mulf %20, %20 : vector<32x128xf32>
    %22 = arith.mulf %20, %21 : vector<32x128xf32>
    %cst_4 = arith.constant -1.95152956E-4 : f32
    %23 = vector.broadcast %cst_4 : f32 to vector<32x128xf32>
    %24 = arith.mulf %21, %23 : vector<32x128xf32>
    %cst_5 = arith.constant 0.00833216123 : f32
    %25 = vector.broadcast %cst_5 : f32 to vector<32x128xf32>
    %26 = arith.addf %25, %24 : vector<32x128xf32>
    %27 = arith.mulf %21, %26 : vector<32x128xf32>
    %cst_6 = arith.constant -0.166666552 : f32
    %28 = vector.broadcast %cst_6 : f32 to vector<32x128xf32>
    %29 = arith.addf %28, %27 : vector<32x128xf32>
    %30 = arith.mulf %22, %29 : vector<32x128xf32>
    %31 = arith.addf %20, %30 : vector<32x128xf32>
    %cst_7 = arith.constant 5.000000e-01 : f32
    %32 = vector.broadcast %cst_7 : f32 to vector<32x128xf32>
    %33 = arith.mulf %32, %21 : vector<32x128xf32>
    %cst_8 = arith.constant 1.000000e+00 : f32
    %34 = vector.broadcast %cst_8 : f32 to vector<32x128xf32>
    %35 = arith.subf %34, %33 : vector<32x128xf32>
    %36 = arith.mulf %21, %21 : vector<32x128xf32>
    %cst_9 = arith.constant 2.44331568E-5 : f32
    %37 = vector.broadcast %cst_9 : f32 to vector<32x128xf32>
    %38 = arith.mulf %21, %37 : vector<32x128xf32>
    %cst_10 = arith.constant -0.00138873165 : f32
    %39 = vector.broadcast %cst_10 : f32 to vector<32x128xf32>
    %40 = arith.addf %39, %38 : vector<32x128xf32>
    %41 = arith.mulf %21, %40 : vector<32x128xf32>
    %cst_11 = arith.constant 0.0416666456 : f32
    %42 = vector.broadcast %cst_11 : f32 to vector<32x128xf32>
    %43 = arith.addf %42, %41 : vector<32x128xf32>
    %44 = arith.mulf %36, %43 : vector<32x128xf32>
    %45 = arith.addf %35, %44 : vector<32x128xf32>
    %46 = arith.fptosi %11 : vector<32x128xf32> to vector<32x128xi32>
    %c3_i32 = arith.constant 3 : i32
    %47 = vector.broadcast %c3_i32 : i32 to vector<32x128xi32>
    %48 = arith.andi %46, %47 : vector<32x128xi32>
    %c1_i32 = arith.constant 1 : i32
    %49 = vector.broadcast %c1_i32 : i32 to vector<32x128xi32>
    %50 = arith.andi %48, %49 : vector<32x128xi32>
    %c1_i32_12 = arith.constant 1 : i32
    %51 = vector.broadcast %c1_i32_12 : i32 to vector<32x128xi32>
    %52 = arith.cmpi eq, %50, %51 : vector<32x128xi32>
    %53 = arith.select %52, %45, %31 : vector<32x128xi1>, vector<32x128xf32>
    %54 = arith.select %52, %31, %45 : vector<32x128xi1>, vector<32x128xf32>
    %c2_i32 = arith.constant 2 : i32
    %55 = vector.broadcast %c2_i32 : i32 to vector<32x128xi32>
    %56 = arith.cmpi sge, %48, %55 : vector<32x128xi32>
    %cst_13 = arith.constant 0.000000e+00 : f32
    %57 = vector.broadcast %cst_13 : f32 to vector<32x128xf32>
    %58 = arith.subf %57, %53 : vector<32x128xf32>
    %59 = arith.select %56, %58, %53 : vector<32x128xi1>, vector<32x128xf32>
    %c1_i32_14 = arith.constant 1 : i32
    %60 = vector.broadcast %c1_i32_14 : i32 to vector<32x128xi32>
    %61 = arith.cmpi eq, %48, %60 : vector<32x128xi32>
    %c2_i32_15 = arith.constant 2 : i32
    %62 = vector.broadcast %c2_i32_15 : i32 to vector<32x128xi32>
    %63 = arith.cmpi eq, %48, %62 : vector<32x128xi32>
    %64 = arith.ori %61, %63 : vector<32x128xi1>
    %cst_16 = arith.constant 0.000000e+00 : f32
    %65 = vector.broadcast %cst_16 : f32 to vector<32x128xf32>
    %66 = arith.subf %65, %54 : vector<32x128xf32>
    %67 = arith.select %64, %66, %54 : vector<32x128xi1>, vector<32x128xf32>
    %c0_17 = arith.constant 0 : index
    %c0_18 = arith.constant 0 : index
    %68 = vector.load %arg2[%c0_17, %c0_18] : memref<32x128xf32, #tpu.memory_space<vmem>>, vector<32x128xf32>
    tpu.vector_store %arg2[%c0_17, %c0_18], %67 {strides = array<i32>} : memref<32x128xf32, #tpu.memory_space<vmem>>, vector<32x128xf32>,
    %c0_19 = arith.constant 0 : index
    %c0_20 = arith.constant 0 : index
    %69 = vector.load %arg3[%c0_19, %c0_20] : memref<32x128xf32, #tpu.memory_space<vmem>>, vector<32x128xf32>
    tpu.vector_store %arg3[%c0_19, %c0_20], %59 {strides = array<i32>} : memref<32x128xf32, #tpu.memory_space<vmem>>, vector<32x128xf32>,
    return
  }
  func.func @transform_0(%arg0: i32) -> (i32, i32) {
    %c0_i32 = arith.constant 0 : i32
    %c0_i32_0 = arith.constant 0 : i32
    %c0_i32_1 = arith.constant 0 : i32
    return %c0_i32, %c0_i32_0 : i32, i32
  }
  func.func @transform_1(%arg0: i32) -> (i32, i32) {
    %c0_i32 = arith.constant 0 : i32
    %c0_i32_0 = arith.constant 0 : i32
    return %arg0, %c0_i32 : i32, i32
  }
  func.func @transform_2(%arg0: i32) -> (i32, i32) {
    %c0_i32 = arith.constant 0 : i32
    %c0_i32_0 = arith.constant 0 : i32
    return %arg0, %c0_i32 : i32, i32
  }
}

</mosaic_0001>

<llo_original>
// kernel: tpu_custom_call.1
$region0: #{tpu_custom_call.1}
  #allocation0 [shape = 'u32[]', space=smem, size = 0x4, offset = 0x4, fixed_abs, tag = 'smem constant byte address 0x4 - core index']
  #allocation1 [shape = 'u32[144,128]{1,0:T(1,128)}', space=vmem, size = 0x12000, scoped, tag = 'internal scratch']
  %s0 = inlined_call_operand.hbm [shape: f32[1,128], index: 0, kind: input, shape index: {}]
  %s1 = inlined_call_operand.hbm [shape: f32[64,128], index: 1, kind: output, shape index: {0}]
  %s2 = inlined_call_operand.hbm [shape: f32[64,128], index: 2, kind: output, shape index: {1}]
  %3 = xla_tuple %s1, %s2
  %s4 = sld [smem:[#allocation0]]
  $region49: #{tpu_custom_call.1} parent=0
    _
  %s6 = ssub.s32 1, %s4
  %s7 = scalar_select 0, %s6, %s4
  $region1: #{tpu_custom_call.1} parent=0
    #allocation2 [shape = 'u8[512]{0}', space=vmem, size = 0x400, scoped, tag = 'input window, operand 0, single buffered']
    #allocation3 [shape = 's32[2]{0}', space=sflag, size = 0x8, scoped, tag = 'scoped memory for tpu_custom_call.1']
    #allocation4 [shape = 's32[2]{0}', space=sflag, size = 0x8, scoped, tag = 'scoped memory for tpu_custom_call.1']
    #allocation5 [shape = 'u8[32768]{0}', space=vmem, size = 0x8000, scoped, tag = 'output window, operand 0']
    #allocation6 [shape = 'u8[32768]{0}', space=vmem, size = 0x8000, scoped, tag = 'output window, operand 1']
    #allocation7 [shape = 's32[2]{0}', space=sflag, size = 0x8, scoped, tag = 'scoped memory for tpu_custom_call.1']
    %8 = vsyncpa [#allocation3], 0
    %9 = vsyncpa [#allocation4], 0
    %s10 = scalar_lea.sflag [#allocation4], 1
    %11 = vsyncpa %s10, 0
    %12 = vsyncpa [#allocation7], 0
    %s13 = scalar_lea.sflag [#allocation7], 1
    %14 = vsyncpa %s13, 0
    loop: start=0, step=1, limit=4
    $region2: #{tpu_custom_call.1} parent=1 // loop_pre_header
      _
    $region3: #{tpu_custom_call.1} parent=1 // loop_header
      %s16 = sphi 0, %s20
      %p17 = scmp.ge.s32.totalorder %s16, 4
      %s24 = sphi 0, %s24
      %s26 = sphi 0, %s24
      %s27 = sphi 0, %s26
      %s41 = sphi 0, %s27
      %s47 = sphi 0, %s49
      %s50 = sphi 0, %s47
      %s51 = sphi 0, %s50
      %s67 = sphi 0, %s51
      %s73 = sphi 0, %s75
      %s76 = sphi 0, %s73
      %s77 = sphi 0, %s76
      %s93 = sphi 0, %s77
    $region4: #{tpu_custom_call.1} parent=1 // loop_header_branch
      %19 = sbr.rel (%p17) target = $region8
    $region5: #{tpu_custom_call.1} parent=1 // loop_body
      %s21 = ssub.s32 %s16, 1
      %s22 = ssub.s32 %s16, 2
      %s23 = sadd.s32 %s16, 1
      %s25 = sadd.s32 %s24, 1
      %p28 = scmp.eq.s32.totalorder %s16, 1
      %p29 = scmp.ne.s32.totalorder %s24, %s26
      %p30 = scmp.eq.s32.totalorder %s16, 0
      %p31 = por %p29, %p30
      %p32 = scmp.ne.s32.totalorder %s24, %s26
      %p33 = scmp.eq.s32.totalorder %s21, 1
      %p34 = por %p32, %p33
      %p35 = scmp.ne.s32.totalorder %s26, %s27
      %p36 = scmp.eq.s32.totalorder %s21, 0
      %p37 = por %p35, %p36
      %p38 = scmp.ne.s32.totalorder %s26, %s27
      %p39 = scmp.eq.s32.totalorder %s22, 1
      %p40 = por %p38, %p39
      %p42 = scmp.ne.s32.totalorder %s27, %s41
      %p43 = scmp.eq.s32.totalorder %s22, 0
      %p44 = por %p42, %p43
      %s45 = ssub.s32 %s16, %s23
      %p46 = scmp.eq.s32.totalorder %s45, 0
      %s48 = sadd.s32 %s47, 1
      %s49 = scalar_select %p46, %s47, %s48
      %p52 = pneg %p46
      %p53 = scmp.eq.s32.totalorder %s16, 1
      %p54 = por %p52, %p53
      %p55 = scmp.ne.s32.totalorder %s47, %s50
      %p56 = scmp.eq.s32.totalorder %s16, 0
      %p57 = por %p55, %p56
      %p58 = scmp.ne.s32.totalorder %s47, %s50
      %p59 = scmp.eq.s32.totalorder %s21, 1
      %p60 = por %p58, %p59
      %p61 = scmp.ne.s32.totalorder %s50, %s51
      %p62 = scmp.eq.s32.totalorder %s21, 0
      %p63 = por %p61, %p62
      %p64 = scmp.ne.s32.totalorder %s50, %s51
      %p65 = scmp.eq.s32.totalorder %s22, 1
      %p66 = por %p64, %p65
      %p68 = scmp.ne.s32.totalorder %s51, %s67
      %p69 = scmp.eq.s32.totalorder %s22, 0
      %p70 = por %p68, %p69
      %s71 = ssub.s32 %s16, %s23
      %p72 = scmp.eq.s32.totalorder %s71, 0
      %s74 = sadd.s32 %s73, 1
      %s75 = scalar_select %p72, %s73, %s74
      %p78 = pneg %p72
      %p79 = scmp.eq.s32.totalorder %s16, 1
      %p80 = por %p78, %p79
      %p81 = scmp.ne.s32.totalorder %s73, %s76
      %p82 = scmp.eq.s32.totalorder %s16, 0
      %p83 = por %p81, %p82
      %p84 = scmp.ne.s32.totalorder %s73, %s76
      %p85 = scmp.eq.s32.totalorder %s21, 1
      %p86 = por %p84, %p85
      %p87 = scmp.ne.s32.totalorder %s76, %s77
      %p88 = scmp.eq.s32.totalorder %s21, 0
      %p89 = por %p87, %p88
      %p90 = scmp.ne.s32.totalorder %s76, %s77
      %p91 = scmp.eq.s32.totalorder %s22, 1
      %p92 = por %p90, %p91
      %p94 = scmp.ne.s32.totalorder %s77, %s93
      %p95 = scmp.eq.s32.totalorder %s22, 0
      %p96 = por %p94, %p95
      %p97 = scmp.le.s32.totalorder 1, %s16
      %p98 = scmp.lt.s32.totalorder %s16, 3
      %p99 = pnand %p97, %p98
      %p100 = pneg %p99
      // Predicated region
      $region9: #{tpu_custom_call.1} parent=5 // pred_check
        _
      $region10: #{tpu_custom_call.1} parent=5 // pred_check_branch
        %102 = sbr.rel (%p99) target = $region12
      $region11: #{tpu_custom_call.1} parent=5 // pred_region
        %s103 = ssub.s32 %s16, 1
        // Predicated region
        $region13: #{tpu_custom_call.1} parent=11 // pred_check
          %p104 = pneg %p37
        $region14: #{tpu_custom_call.1} parent=11 // pred_check_branch
          %106 = sbr.rel (%p104) target = $region16
        $region15: #{tpu_custom_call.1} parent=11 // pred_region
          %s108 = ssub.s32 16, 16
          %109 = vsyncadd [#allocation3], %s108
          %s111 = sshll.u32 [#allocation2], 4
          %s112 = int_to_ptr.vmem [resolvable:$true] %s111
          %114 = dma.hbm_to_vmem [thread:$0]  %s0, 16, %s112, [#allocation3]
        $region16: #{tpu_custom_call.1} parent=11 // pred_fallthru
          _
      $region12: #{tpu_custom_call.1} parent=5 // pred_fallthru
        _
      %p115 = scmp.lt.s32.totalorder %s16, 2
      // Predicated region
      $region17: #{tpu_custom_call.1} parent=5 // pred_check
        %p116 = pneg %p115
      $region18: #{tpu_custom_call.1} parent=5 // pred_check_branch
        %118 = sbr.rel (%p116) target = $region20
      $region19: #{tpu_custom_call.1} parent=5 // pred_region
        _
      $region20: #{tpu_custom_call.1} parent=5 // pred_fallthru
        _
      %p119 = scmp.le.s32.totalorder 1, %s16
      %p120 = scmp.lt.s32.totalorder %s16, 3
      %p121 = pnand %p119, %p120
      %p122 = pneg %p121
      // Predicated region
      $region21: #{tpu_custom_call.1} parent=5 // pred_check
        _
      $region22: #{tpu_custom_call.1} parent=5 // pred_check_branch
        %124 = sbr.rel (%p121) target = $region24
      $region23: #{tpu_custom_call.1} parent=5 // pred_region
        %s125 = ssub.s32 %s16, 1
        // Predicated region
        $region25: #{tpu_custom_call.1} parent=23 // pred_check
          %p126 = pneg %p37
        $region26: #{tpu_custom_call.1} parent=23 // pred_check_branch
          %128 = sbr.rel (%p126) target = $region28
        $region27: #{tpu_custom_call.1} parent=23 // pred_region
          %129 = dma.done [#allocation3], 16
        $region28: #{tpu_custom_call.1} parent=23 // pred_fallthru
          _
        %p130 = pneg %p37
        %p131 = pneg %p34
        %p132 = pneg %p63
        %p133 = pneg %p60
        %s134 = sand.u32 %s50, 1
        %s135 = scalar_lea.sflag [#allocation4], %s134
        %s136 = sand.u32 %s50, 1
        %s137 = smul.addr %s136, 32
        %s138 = scalar_lea.vmem [#allocation5], %s137
        %p139 = pneg %p89
        %p140 = pneg %p86
        %s141 = sand.u32 %s76, 1
        %s142 = scalar_lea.sflag [#allocation7], %s141
        %s143 = sand.u32 %s76, 1
        %s144 = smul.addr %s143, 32
        %s145 = scalar_lea.vmem [#allocation6], %s144
        %s146 = smul.u32 4, %s21
        %s147 = smul.u32 4, %s21
        %s148 = smul.u32 %s21, 32
        %v149 = vlaneseq
        %v150 = vshrl.u32 %v149, 7
        %v151 = vadd.s32 %v150, 8
        %v152 = vadd.s32 %v150, 16
        %v153 = vadd.s32 %v150, 24
        %v154 = vstv %s148
        %v155 = vadd.s32 %v154, %v150
        %v156 = vadd.s32 %v154, %v151
        %v157 = vadd.s32 %v154, %v152
        %v158 = vadd.s32 %v154, %v153
        %v159 = vcvt.s32.f32 %v155
        %v160 = vcvt.s32.f32 %v156
        %v161 = vcvt.s32.f32 %v157
        %v162 = vcvt.s32.f32 %v158
        %v163 = vld [vmem:[#allocation2] sm:$0x1]
        %v165 = vlaneseq
        %v166 = vshrl.u32 %v165, 7
        %v167 = vsub.s32 0, %v166
        %v168 = vrot.slane %v163, %v167
        %v170 = vmul.f32 %v159, %v168
        %v171 = vmul.f32 %v160, %v168
        %v172 = vmul.f32 %v161, %v168
        %v173 = vmul.f32 %v162, %v168
        %v174 = vmul.f32 %v170, 0.63661975
        %v175 = vmul.f32 %v171, 0.63661975
        %v176 = vmul.f32 %v172, 0.63661975
        %v177 = vmul.f32 %v173, 0.63661975
        %v178 = vround.ne.pseudo %v174
        %v179 = vround.ne.pseudo %v175
        %v180 = vround.ne.pseudo %v176
        %v181 = vround.ne.pseudo %v177
        %v182 = vmul.f32 %v178, 1.5703125
        %v183 = vmul.f32 %v179, 1.5703125
        %v184 = vmul.f32 %v180, 1.5703125
        %v185 = vmul.f32 %v181, 1.5703125
        %v186 = vsub.f32 %v170, %v182
        %v187 = vsub.f32 %v171, %v183
        %v188 = vsub.f32 %v172, %v184
        %v189 = vsub.f32 %v173, %v185
        %v190 = vmul.f32 %v178, 0.0004837513
        %v191 = vmul.f32 %v179, 0.0004837513
        %v192 = vmul.f32 %v180, 0.0004837513
        %v193 = vmul.f32 %v181, 0.0004837513
        %v194 = vsub.f32 %v186, %v190
        %v195 = vsub.f32 %v187, %v191
        %v196 = vsub.f32 %v188, %v192
        %v197 = vsub.f32 %v189, %v193
        %v198 = vmul.f32 %v178, 7.54979e-08
        %v199 = vmul.f32 %v179, 7.54979e-08
        %v200 = vmul.f32 %v180, 7.54979e-08
        %v201 = vmul.f32 %v181, 7.54979e-08
        %v202 = vsub.f32 %v194, %v198
        %v203 = vsub.f32 %v195, %v199
        %v204 = vsub.f32 %v196, %v200
        %v205 = vsub.f32 %v197, %v201
        %v206 = vmul.f32 %v202, %v202
        %v207 = vmul.f32 %v203, %v203
        %v208 = vmul.f32 %v204, %v204
        %v209 = vmul.f32 %v205, %v205
        %v210 = vmul.f32 %v202, %v206
        %v211 = vmul.f32 %v203, %v207
        %v212 = vmul.f32 %v204, %v208
        %v213 = vmul.f32 %v205, %v209
        %v214 = vmul.f32 %v206, -0.00019515296
        %v215 = vmul.f32 %v207, -0.00019515296
        %v216 = vmul.f32 %v208, -0.00019515296
        %v217 = vmul.f32 %v209, -0.00019515296
        %v218 = vadd.f32 %v214, 0.008332161
        %v219 = vadd.f32 %v215, 0.008332161
        %v220 = vadd.f32 %v216, 0.008332161
        %v221 = vadd.f32 %v217, 0.008332161
        %v222 = vmul.f32 %v206, %v218
        %v223 = vmul.f32 %v207, %v219
        %v224 = vmul.f32 %v208, %v220
        %v225 = vmul.f32 %v209, %v221
        %v226 = vadd.f32 %v222, -0.16666655
        %v227 = vadd.f32 %v223, -0.16666655
        %v228 = vadd.f32 %v224, -0.16666655
        %v229 = vadd.f32 %v225, -0.16666655
        %v230 = vmul.f32 %v210, %v226
        %v231 = vmul.f32 %v211, %v227
        %v232 = vmul.f32 %v212, %v228
        %v233 = vmul.f32 %v213, %v229
        %v234 = vadd.f32 %v202, %v230
        %v235 = vadd.f32 %v203, %v231
        %v236 = vadd.f32 %v204, %v232
        %v237 = vadd.f32 %v205, %v233
        %v238 = vmul.f32 %v206, 0.5
        %v239 = vmul.f32 %v207, 0.5
        %v240 = vmul.f32 %v208, 0.5
        %v241 = vmul.f32 %v209, 0.5
        %v242 = vsub.f32 1.0, %v238
        %v243 = vsub.f32 1.0, %v239
        %v244 = vsub.f32 1.0, %v240
        %v245 = vsub.f32 1.0, %v241
        %v246 = vmul.f32 %v206, %v206
        %v247 = vmul.f32 %v207, %v207
        %v248 = vmul.f32 %v208, %v208
        %v249 = vmul.f32 %v209, %v209
        %v250 = vmul.f32 %v206, 2.4433157e-05
        %v251 = vmul.f32 %v207, 2.4433157e-05
        %v252 = vmul.f32 %v208, 2.4433157e-05
        %v253 = vmul.f32 %v209, 2.4433157e-05
        %v254 = vadd.f32 %v250, -0.0013887316
        %v255 = vadd.f32 %v251, -0.0013887316
        %v256 = vadd.f32 %v252, -0.0013887316
        %v257 = vadd.f32 %v253, -0.0013887316
        %v258 = vmul.f32 %v206, %v254
        %v259 = vmul.f32 %v207, %v255
        %v260 = vmul.f32 %v208, %v256
        %v261 = vmul.f32 %v209, %v257
        %v262 = vadd.f32 %v258, 0.041666646
        %v263 = vadd.f32 %v259, 0.041666646
        %v264 = vadd.f32 %v260, 0.041666646
        %v265 = vadd.f32 %v261, 0.041666646
        %v266 = vmul.f32 %v246, %v262
        %v267 = vmul.f32 %v247, %v263
        %v268 = vmul.f32 %v248, %v264
        %v269 = vmul.f32 %v249, %v265
        %v270 = vadd.f32 %v242, %v266
        %v271 = vadd.f32 %v243, %v267
        %v272 = vadd.f32 %v244, %v268
        %v273 = vadd.f32 %v245, %v269
        %v274 = vcvt.f32.s32.ties.to.even %v174
        %v275 = vcvt.f32.s32.ties.to.even %v175
        %v276 = vcvt.f32.s32.ties.to.even %v176
        %v277 = vcvt.f32.s32.ties.to.even %v177
        %v278 = vand.u32 %v274, 3
        %v279 = vand.u32 %v275, 3
        %v280 = vand.u32 %v276, 3
        %v281 = vand.u32 %v277, 3
        %v282 = vand.u32 %v278, 1
        %v283 = vand.u32 %v279, 1
        %v284 = vand.u32 %v280, 1
        %v285 = vand.u32 %v281, 1
        %vm286 = vcmp.eq.s32.totalorder %v282, 1
        %vm287 = vcmp.eq.s32.totalorder %v283, 1
        %vm288 = vcmp.eq.s32.totalorder %v284, 1
        %vm289 = vcmp.eq.s32.totalorder %v285, 1
        %v290 = vsel %vm286, %v270, %v234
        %v291 = vsel %vm287, %v271, %v235
        %v292 = vsel %vm288, %v272, %v236
        %v293 = vsel %vm289, %v273, %v237
        %v294 = vsel %vm286, %v234, %v270
        %v295 = vsel %vm287, %v235, %v271
        %v296 = vsel %vm288, %v236, %v272
        %v297 = vsel %vm289, %v237, %v273
        %vm298 = vcmp.ge.s32.totalorder %v278, 2
        %vm299 = vcmp.ge.s32.totalorder %v279, 2
        %vm300 = vcmp.ge.s32.totalorder %v280, 2
        %vm301 = vcmp.ge.s32.totalorder %v281, 2
        %v302 = vsub.f32 0.0, %v290
        %v303 = vsub.f32 0.0, %v291
        %v304 = vsub.f32 0.0, %v292
        %v305 = vsub.f32 0.0, %v293
        %v306 = vsel %vm298, %v302, %v290
        %v307 = vsel %vm299, %v303, %v291
        %v308 = vsel %vm300, %v304, %v292
        %v309 = vsel %vm301, %v305, %v293
        %vm310 = vcmp.eq.s32.totalorder %v278, 1
        %vm311 = vcmp.eq.s32.totalorder %v279, 1
        %vm312 = vcmp.eq.s32.totalorder %v280, 1
        %vm313 = vcmp.eq.s32.totalorder %v281, 1
        %vm314 = vcmp.eq.s32.totalorder %v278, 2
        %vm315 = vcmp.eq.s32.totalorder %v279, 2
        %vm316 = vcmp.eq.s32.totalorder %v280, 2
        %vm317 = vcmp.eq.s32.totalorder %v281, 2
        %vm318 = vmor %vm310, %vm314
        %vm319 = vmor %vm311, %vm315
        %vm320 = vmor %vm312, %vm316
        %vm321 = vmor %vm313, %vm317
        %v322 = vsub.f32 0.0, %v294
        %v323 = vsub.f32 0.0, %v295
        %v324 = vsub.f32 0.0, %v296
        %v325 = vsub.f32 0.0, %v297
        %v326 = vsel %vm318, %v322, %v294
        %v327 = vsel %vm319, %v323, %v295
        %v328 = vsel %vm320, %v324, %v296
        %v329 = vsel %vm321, %v325, %v297
        %330 = vst [vmem:[%s138] sm:$0xff] %v326
        %331 = vst [vmem:[%s138 + $0x8] sm:$0xff] %v327
        %332 = vst [vmem:[%s138 + $0x10] sm:$0xff] %v328
        %333 = vst [vmem:[%s138 + $0x18] sm:$0xff] %v329
        %334 = vst [vmem:[%s145] sm:$0xff] %v306
        %335 = vst [vmem:[%s145 + $0x8] sm:$0xff] %v307
        %336 = vst [vmem:[%s145 + $0x10] sm:$0xff] %v308
        %337 = vst [vmem:[%s145 + $0x18] sm:$0xff] %v309
        %s338 = sand.u32 %s50, 1
        %s339 = scalar_lea.sflag [#allocation4], %s338
        %s340 = sand.u32 %s50, 1
        %s341 = smul.addr %s340, 32
        %s342 = scalar_lea.vmem [#allocation5], %s341
        %s343 = sand.u32 %s76, 1
        %s344 = scalar_lea.sflag [#allocation7], %s343
        %s345 = sand.u32 %s76, 1
        %s346 = smul.addr %s345, 32
        %s347 = scalar_lea.vmem [#allocation6], %s346
        // Predicated region
        $region29: #{tpu_custom_call.1} parent=23 // pred_check
          %p348 = pneg %p60
        $region30: #{tpu_custom_call.1} parent=23 // pred_check_branch
          %350 = sbr.rel (%p348) target = $region32
        $region31: #{tpu_custom_call.1} parent=23 // pred_region
          %s351 = smul.u32 4, %s21
          %s353 = ssub.s32 512, 512
          %354 = vsyncadd %s339, %s353
          %s355 = smul.addr %s351, 128
          %s356 = scalar_lea.hbm %s1, %s355
          %s357 = sshll.u32 %s342, 4
          %s358 = int_to_ptr.vmem [resolvable:$true] %s357
          %363 = dma.vmem_to_hbm [thread:$0]  %s358, 512, %s356, %s339, 128, 128, 8
        $region32: #{tpu_custom_call.1} parent=23 // pred_fallthru
          _
        // Predicated region
        $region33: #{tpu_custom_call.1} parent=23 // pred_check
          %p364 = pneg %p86
        $region34: #{tpu_custom_call.1} parent=23 // pred_check_branch
          %366 = sbr.rel (%p364) target = $region36
        $region35: #{tpu_custom_call.1} parent=23 // pred_region
          %s367 = smul.u32 4, %s21
          %s369 = ssub.s32 512, 512
          %370 = vsyncadd %s344, %s369
          %s371 = smul.addr %s367, 128
          %s372 = scalar_lea.hbm %s2, %s371
          %s373 = sshll.u32 %s347, 4
          %s374 = int_to_ptr.vmem [resolvable:$true] %s373
          %379 = dma.vmem_to_hbm [thread:$0]  %s374, 512, %s372, %s344, 128, 128, 8
        $region36: #{tpu_custom_call.1} parent=23 // pred_fallthru
          _
      $region24: #{tpu_custom_call.1} parent=5 // pred_fallthru
        _
      %p380 = scmp.le.s32.totalorder 2, %s16
      // Predicated region
      $region37: #{tpu_custom_call.1} parent=5 // pred_check
        %p381 = pneg %p380
      $region38: #{tpu_custom_call.1} parent=5 // pred_check_branch
        %383 = sbr.rel (%p381) target = $region40
      $region39: #{tpu_custom_call.1} parent=5 // pred_region
        %s384 = ssub.s32 %s16, 2
        // Predicated region
        $region41: #{tpu_custom_call.1} parent=39 // pred_check
          %p385 = pneg %p66
        $region42: #{tpu_custom_call.1} parent=39 // pred_check_branch
          %387 = sbr.rel (%p385) target = $region44
        $region43: #{tpu_custom_call.1} parent=39 // pred_region
          %s388 = sand.u32 %s51, 1
          %s389 = scalar_lea.sflag [#allocation4], %s388
          %s390 = sand.u32 %s51, 1
          %s391 = smul.addr %s390, 32
          %s392 = scalar_lea.vmem [#allocation5], %s391
          %393 = dma.done %s389, 512
        $region44: #{tpu_custom_call.1} parent=39 // pred_fallthru
          _
        // Predicated region
        $region45: #{tpu_custom_call.1} parent=39 // pred_check
          %p394 = pneg %p92
        $region46: #{tpu_custom_call.1} parent=39 // pred_check_branch
          %396 = sbr.rel (%p394) target = $region48
        $region47: #{tpu_custom_call.1} parent=39 // pred_region
          %s397 = sand.u32 %s77, 1
          %s398 = scalar_lea.sflag [#allocation7], %s397
          %s399 = sand.u32 %s77, 1
          %s400 = smul.addr %s399, 32
          %s401 = scalar_lea.vmem [#allocation6], %s400
          %402 = dma.done %s398, 512
        $region48: #{tpu_custom_call.1} parent=39 // pred_fallthru
          _
      $region40: #{tpu_custom_call.1} parent=5 // pred_fallthru
        _
    $region6: #{tpu_custom_call.1} parent=1 // loop_footer
      %s20 = sadd.s32 1, %s16
    $region7: #{tpu_custom_call.1} parent=1 // loop_footer_branch
      %15 = sbr.rel target = $region3
    $region8: #{tpu_custom_call.1} parent=1 // loop_exit
      _
    %403 = vsyncpa [#allocation3], 1
    %s404 = scalar_lea.sflag [#allocation3], 1
    %405 = vsyncpa %s404, 1
    %406 = vsyncpa [#allocation4], 1
    %s407 = scalar_lea.sflag [#allocation4], 1
    %408 = vsyncpa %s407, 1
    %409 = vsyncpa [#allocation7], 1
    %s410 = scalar_lea.sflag [#allocation7], 1
    %411 = vsyncpa %s410, 1

</llo_original>
